<compile_context>
chip_gen: v5e
topology: v5e:2x2
jax: 0.10.0
libtpu: 0.0.40
codegen_flags: <defaults>
</compile_context>

<pallas_src>
import functools

import jax
import jax.numpy as jnp
from jax.experimental import pallas as pl
from jax.experimental.pallas import tpu as pltpu

EPS_LN = 1e-5
EPS_BN = 1e-5


def _layer_norm(x, g, b):
    mu = jnp.mean(x, axis=-1, keepdims=True)
    var = jnp.mean((x - mu) ** 2, axis=-1, keepdims=True)
    return (x - mu) * jax.lax.rsqrt(var + EPS_LN) * g + b


# ----------------------------------- kernel -----------------------------------
def conv_module_kernel(x_ref, lng_ref, lnb_ref, wv_ref, wg_ref, dw_ref,
                       bns_ref, bnb_ref, wo_ref, out_ref, glu_scr,
                       *, T, tile_t, pad, compute_dtype):
    """One (batch, T-tile) step of the fused ConvolutionModule forward."""
    K = dw_ref.shape[0]
    Cc = glu_scr.shape[-1]
    W = tile_t + 2 * pad            # logical halo window length
    W_read = min(W, T)              # rows of the input actually read (static)

    t0 = pl.program_id(1) * tile_t  # absolute start row of this tile

    # Zero the boundary pad regions of the scratch.  Scratch row j corresponds to absolute row
    # (t0 - 2*pad + j); the only rows the depthwise taps can read that are NOT rewritten below are
    # out-of-range rows, and those always fall inside these two static slices.
    if pad > 0:
        zeros = jnp.zeros((2 * pad, Cc), jnp.float32)
        glu_scr[0:2 * pad, :] = zeros
        glu_scr[W:W + 2 * pad, :] = zeros

    # LayerNorm + pointwise conv1 (value / gate halves) + GLU over the clamped halo window.
    s = jnp.clip(t0 - pad, 0, T - W_read)                      # clamped window start (>= 0)
    xw = x_ref[0, pl.ds(s, W_read), :]                         # (W_read, C)
    h = _layer_norm(xw, lng_ref[...], lnb_ref[...]).astype(compute_dtype)
    val = jnp.dot(h, wv_ref[...], preferred_element_type=jnp.float32)   # (W_read, Cc)
    gate = jnp.dot(h, wg_ref[...], preferred_element_type=jnp.float32)  # (W_read, Cc)
    glu = val * jax.nn.sigmoid(gate)

    # Place the window into the absolute-row-aligned, zero-padded scratch.
    dst = s - t0 + 2 * pad                                     # in [0, 2*pad]
    glu_scr[pl.ds(dst, W_read), :] = glu

    # Depthwise conv ('SAME' zero padding): K static sublane-offset reads + MAC (pure VPU).
    dw = dw_ref[...]                                           # (K, Cc)
    acc = jnp.zeros((tile_t, Cc), jnp.float32)
    for k in range(K):
        acc = acc + glu_scr[k + pad:k + pad + tile_t, :] * dw[k:k + 1, :]

    # BatchNorm (eval, pre-folded scale/shift) + swish + pointwise conv2.
    y = acc * bns_ref[...] + bnb_ref[...]
    y = (y * jax.nn.sigmoid(y)).astype(compute_dtype)
    out = jnp.dot(y, wo_ref[...], preferred_element_type=jnp.float32)   # (tile_t, C)
    out_ref[0, :, :] = out.astype(out_ref.dtype)


# ---------------------------------- wrapper ------------------------------------
def _pick_tile_t(T, target):
    """Largest divisor of T that is <= target and a multiple of 8 (else full T)."""
    for cand in range(min(target, T), 0, -1):
        if T % cand == 0 and (cand % 8 == 0 or cand == T):
            return cand
    return T


def convolution_module_forward(x, params, depthwise_kernel_size, *,
                               tile_t_target=256, compute_dtype=jnp.float32,
                               vmem_limit_bytes=None):
    """x: (B, T, C) float32 -> (B, T, C).  Matches ConvolutionModule.forward (eval mode)."""
    B, T, C = x.shape
    K = depthwise_kernel_size
    pad = (K - 1) // 2
    Cc = params['dw'].shape[1]

    tile_t = _pick_tile_t(T, tile_t_target)
    n_t = T // tile_t

    # Fold BatchNorm (eval) into one scale / shift; cast matmul weights to the compute dtype.
    bn_scale = (params['bn_g'] / jnp.sqrt(params['bn_rv'] + EPS_BN)).astype(jnp.float32)
    bn_shift = (params['bn_b'] - params['bn_rm'] * bn_scale).astype(jnp.float32)
    w_val = params['w_val'].astype(compute_dtype)
    w_gate = params['w_gate'].astype(compute_dtype)
    w_out = params['w_out'].astype(compute_dtype)

    def full2d(r, c):  # whole-array operand, pinned across the grid
        return pl.BlockSpec((r, c), lambda b, t: (0, 0))

    wbytes = jnp.dtype(compute_dtype).itemsize
    flops = B * T * (4 * C * Cc + 2 * Cc * C + 2 * Cc * K)
    bytes_accessed = int(2 * B * T * C * 4 + (2 * C * Cc + Cc * C) * wbytes
                         + (K + 4) * Cc * 4 + 2 * C * 4)

    kernel = functools.partial(conv_module_kernel, T=T, tile_t=tile_t, pad=pad,
                               compute_dtype=compute_dtype)

    return pl.pallas_call(
        kernel,
        out_shape=jax.ShapeDtypeStruct((B, T, C), x.dtype),
        grid=(B, n_t),
        in_specs=[
            pl.BlockSpec((1, T, C), lambda b, t: (b, 0, 0)),   # input: resident across the T tiles of a batch
            full2d(1, C), full2d(1, C),                        # layer-norm gamma / beta
            full2d(C, Cc), full2d(C, Cc),                      # pointwise conv1: value / gate halves
            full2d(K, Cc),                                     # depthwise taps (dw[k, c] = conv.weight[c, 0, k])
            full2d(1, Cc), full2d(1, Cc),                      # folded batch-norm scale / shift
            full2d(Cc, C),                                     # pointwise conv2
        ],
        out_specs=pl.BlockSpec((1, tile_t, C), lambda b, t: (b, t, 0)),
        scratch_shapes=[pltpu.VMEM((tile_t + 4 * pad, Cc), jnp.float32)],
        compiler_params=pltpu.CompilerParams(
            dimension_semantics=("parallel", "parallel"),
            vmem_limit_bytes=vmem_limit_bytes),
        cost_estimate=pl.CostEstimate(flops=flops,
                                      transcendentals=2 * B * T * Cc,
                                      bytes_accessed=bytes_accessed),
    )(x, params['ln_g'], params['ln_b'], w_val, w_gate, params['dw'],
      bn_scale, bn_shift, w_out)


# ------------------------- deterministic parameter init ------------------------
def init_params(key, embed_dim, channels, K):
    ks = jax.random.split(key, 10)

    def nrm(k, shape, s=0.05):
        return (s * jax.random.normal(k, shape)).astype(jnp.float32)

    return dict(
        ln_g=1.0 + nrm(ks[0], (1, embed_dim)),
        ln_b=nrm(ks[1], (1, embed_dim)),
        w_val=nrm(ks[2], (embed_dim, channels)),    # first half of pointwise_conv1 (GLU value path)
        w_gate=nrm(ks[3], (embed_dim, channels)),   # second half of pointwise_conv1 (GLU gate path)
        dw=nrm(ks[4], (K, channels)),               # depthwise taps
        bn_rm=nrm(ks[5], (1, channels)),
        bn_rv=1.0 + 0.1 * jnp.abs(nrm(ks[6], (1, channels))),
        bn_g=1.0 + nrm(ks[7], (1, channels)),
        bn_b=nrm(ks[8], (1, channels)),
        w_out=nrm(ks[9], (channels, embed_dim)),    # pointwise_conv2
    )


# ------------------------------ pure-JAX reference ------------------------------
def reference_forward(x, p, K):
    B, T, C = x.shape
    pad = (K - 1) // 2
    mu = x.mean(-1, keepdims=True)
    var = ((x - mu) ** 2).mean(-1, keepdims=True)
    h = (x - mu) / jnp.sqrt(var + EPS_LN) * p['ln_g'] + p['ln_b']
    g = (h @ p['w_val']) * jax.nn.sigmoid(h @ p['w_gate'])        # GLU over channel dim
    gp = jnp.pad(g, ((0, 0), (pad, pad), (0, 0)))                 # 'SAME' zero padding
    y = jnp.zeros_like(g)
    for k in range(K):
        y = y + gp[:, k:k + T, :] * p['dw'][k][None, None, :]     # depthwise conv
    y = (y - p['bn_rm']) / jnp.sqrt(p['bn_rv'] + EPS_BN) * p['bn_g'] + p['bn_b']
    y = y * jax.nn.sigmoid(y)                                     # swish
    return y @ p['w_out']


# ------------------------------------ main --------------------------------------
if __name__ == "__main__":
    B, T, C, Cc, K = 2, 32, 32, 48, 7   # batch, seq, embed_dim, channels, depthwise kernel size
    key = jax.random.PRNGKey(0)
    kp, kx = jax.random.split(key)
    params = init_params(kp, C, Cc, K)
    x = jax.random.normal(kx, (B, T, C), dtype=jnp.float32)

    ref = reference_forward(x, params, K)

    # f32 matmul path (grid (B, 2) -> halo / tiling logic exercised).
    out = convolution_module_forward(x, params, K, tile_t_target=16,
                                     compute_dtype=jnp.float32)
    jax.block_until_ready(out)
    assert out.shape == (B, T, C)
    err = float(jnp.max(jnp.abs(out - ref)))
    assert jnp.allclose(out, ref, atol=1e-3, rtol=1e-3), err

    # bf16 matmul inputs / f32 accumulation (v6e / v7x MXU path).
    out_bf16 = convolution_module_forward(x, params, K, tile_t_target=16,
                                          compute_dtype=jnp.bfloat16)
    jax.block_until_ready(out_bf16)
    err_bf16 = float(jnp.max(jnp.abs(out_bf16 - ref)))
    assert jnp.allclose(out_bf16, ref, atol=3e-2, rtol=3e-2), err_bf16

    print("KERNEL_OK")
</pallas_src>

<mosaic_0001>
module attributes {stable_mosaic.version = 11 : i64} {
  func.func @conv_module_kernel(%arg0: i32, %arg1: i32, %arg2: memref<1x32x32xf32, #tpu.memory_space<vmem>>, %arg3: memref<1x32xf32, #tpu.memory_space<vmem>>, %arg4: memref<1x32xf32, #tpu.memory_space<vmem>>, %arg5: memref<32x48xf32, #tpu.memory_space<vmem>>, %arg6: memref<32x48xf32, #tpu.memory_space<vmem>>, %arg7: memref<7x48xf32, #tpu.memory_space<vmem>>, %arg8: memref<1x48xf32, #tpu.memory_space<vmem>>, %arg9: memref<1x48xf32, #tpu.memory_space<vmem>>, %arg10: memref<48x32xf32, #tpu.memory_space<vmem>>, %arg11: memref<1x16x32xf32, #tpu.memory_space<vmem>>, %arg12: memref<28x48xf32, #tpu.memory_space<vmem>>) attributes {dimension_semantics = [#tpu.dimension_semantics<parallel>, #tpu.dimension_semantics<parallel>], iteration_bounds = array<i64: 2, 2>, scalar_prefetch = 0 : i64, scratch_operands = 1 : i64, tpu.core_type = #tpu.core_type<tc>, window_params = [{transform_indices = @transform_0, window_bounds = array<i64: 1, 32, 32>}, {pipeline_mode = #tpu.pipeline_mode<synchronous>, transform_indices = @transform_1, window_bounds = array<i64: 1, 32>}, {pipeline_mode = #tpu.pipeline_mode<synchronous>, transform_indices = @transform_2, window_bounds = array<i64: 1, 32>}, {pipeline_mode = #tpu.pipeline_mode<synchronous>, transform_indices = @transform_3, window_bounds = array<i64: 32, 48>}, {pipeline_mode = #tpu.pipeline_mode<synchronous>, transform_indices = @transform_4, window_bounds = array<i64: 32, 48>}, {pipeline_mode = #tpu.pipeline_mode<synchronous>, transform_indices = @transform_5, window_bounds = array<i64: 7, 48>}, {pipeline_mode = #tpu.pipeline_mode<synchronous>, transform_indices = @transform_6, window_bounds = array<i64: 1, 48>}, {pipeline_mode = #tpu.pipeline_mode<synchronous>, transform_indices = @transform_7, window_bounds = array<i64: 1, 48>}, {pipeline_mode = #tpu.pipeline_mode<synchronous>, transform_indices = @transform_8, window_bounds = array<i64: 48, 32>}, {transform_indices = @transform_9, window_bounds = array<i64: 1, 16, 32>}]} {
    %c16_i32 = arith.constant 16 : i32
    %0 = arith.muli %arg1, %c16_i32 : i32
    %cst = arith.constant 0.000000e+00 : f32
    %1 = vector.broadcast %cst : f32 to vector<6x48xf32>
    %c0 = arith.constant 0 : index
    %c0_0 = arith.constant 0 : index
    %2 = vector.load %arg12[%c0, %c0_0] : memref<28x48xf32, #tpu.memory_space<vmem>>, vector<6x48xf32>
    tpu.vector_store %arg12[%c0, %c0_0], %1 {strides = array<i32>} : memref<28x48xf32, #tpu.memory_space<vmem>>, vector<6x48xf32>,
    %c22 = arith.constant 22 : index
    %c0_1 = arith.constant 0 : index
    %3 = vector.load %arg12[%c22, %c0_1] : memref<28x48xf32, #tpu.memory_space<vmem>>, vector<6x48xf32>
    tpu.vector_store %arg12[%c22, %c0_1], %1 {strides = array<i32>} : memref<28x48xf32, #tpu.memory_space<vmem>>, vector<6x48xf32>,
    %c3_i32 = arith.constant 3 : i32
    %4 = arith.subi %0, %c3_i32 : i32
    %c0_i32 = arith.constant 0 : i32
    %c10_i32 = arith.constant 10 : i32
    %5 = arith.maxsi %c0_i32, %4 : i32
    %6 = arith.minsi %c10_i32, %5 : i32
    %c0_2 = arith.constant 0 : index
    %7 = arith.index_cast %6 : i32 to index
    %c0_3 = arith.constant 0 : index
    %8 = vector.load %arg2[%c0_2, %7, %c0_3] : memref<1x32x32xf32, #tpu.memory_space<vmem>>, vector<1x22x32xf32>
    %9 = vector.shape_cast %8 : vector<1x22x32xf32> to vector<22x32xf32>
    %c0_4 = arith.constant 0 : index
    %c0_5 = arith.constant 0 : index
    %10 = vector.load %arg3[%c0_4, %c0_5] : memref<1x32xf32, #tpu.memory_space<vmem>>, vector<1x32xf32>
    %c0_6 = arith.constant 0 : index
    %c0_7 = arith.constant 0 : index
    %11 = vector.load %arg4[%c0_6, %c0_7] : memref<1x32xf32, #tpu.memory_space<vmem>>, vector<1x32xf32>
    %cst_8 = arith.constant dense<0.000000e+00> : vector<22xf32>
    %12 = vector.multi_reduction <add>, %9, %cst_8 [1] : vector<22x32xf32> to vector<22xf32>
    %13 = vector.shape_cast %12 : vector<22xf32> to vector<22x1xf32>
    %cst_9 = arith.constant 3.200000e+01 : f32
    %14 = vector.broadcast %cst_9 : f32 to vector<22x1xf32>
    %15 = arith.divf %13, %14 : vector<22x1xf32>
    %16 = vector.broadcast %15 : vector<22x1xf32> to vector<22x32xf32>
    %17 = arith.subf %9, %16 : vector<22x32xf32>
    %18 = arith.mulf %17, %17 : vector<22x32xf32>
    %cst_10 = arith.constant dense<0.000000e+00> : vector<22xf32>
    %19 = vector.multi_reduction <add>, %18, %cst_10 [1] : vector<22x32xf32> to vector<22xf32>
    %20 = vector.shape_cast %19 : vector<22xf32> to vector<22x1xf32>
    %cst_11 = arith.constant 3.200000e+01 : f32
    %21 = vector.broadcast %cst_11 : f32 to vector<22x1xf32>
    %22 = arith.divf %20, %21 : vector<22x1xf32>
    %23 = vector.broadcast %15 : vector<22x1xf32> to vector<22x32xf32>
    %24 = arith.subf %9, %23 : vector<22x32xf32>
    %cst_12 = arith.constant 9.99999974E-6 : f32
    %25 = vector.broadcast %cst_12 : f32 to vector<22x1xf32>
    %26 = arith.addf %22, %25 : vector<22x1xf32>
    %27 = math.rsqrt %26 : vector<22x1xf32>
    %28 = vector.broadcast %27 : vector<22x1xf32> to vector<22x32xf32>
    %29 = arith.mulf %24, %28 : vector<22x32xf32>
    %30 = vector.broadcast %10 : vector<1x32xf32> to vector<22x32xf32>
    %31 = arith.mulf %29, %30 : vector<22x32xf32>
    %32 = vector.broadcast %11 : vector<1x32xf32> to vector<22x32xf32>
    %33 = arith.addf %31, %32 : vector<22x32xf32>
    %c0_13 = arith.constant 0 : index
    %c0_14 = arith.constant 0 : index
    %34 = vector.load %arg5[%c0_13, %c0_14] : memref<32x48xf32, #tpu.memory_space<vmem>>, vector<32x48xf32>
    %cst_15 = arith.constant dense<0.000000e+00> : vector<22x48xf32>
    %35 = tpu.matmul %33, %34, %cst_15 {dimension_numbers = #tpu.dot_dimension_numbers<[1], [0], [0], [1], [0, 0, 1, 1], [], []>} : vector<22x32xf32>, vector<32x48xf32>, vector<22x48xf32> -> vector<22x48xf32>
    %c0_16 = arith.constant 0 : index
    %c0_17 = arith.constant 0 : index
    %36 = vector.load %arg6[%c0_16, %c0_17] : memref<32x48xf32, #tpu.memory_space<vmem>>, vector<32x48xf32>
    %cst_18 = arith.constant dense<0.000000e+00> : vector<22x48xf32>
    %37 = tpu.matmul %33, %36, %cst_18 {dimension_numbers = #tpu.dot_dimension_numbers<[1], [0], [0], [1], [0, 0, 1, 1], [], []>} : vector<22x32xf32>, vector<32x48xf32>, vector<22x48xf32> -> vector<22x48xf32>
    %38 = arith.negf %37 : vector<22x48xf32>
    %39 = math.exp %38 : vector<22x48xf32>
    %cst_19 = arith.constant 1.000000e+00 : f32
    %40 = vector.broadcast %cst_19 : f32 to vector<22x48xf32>
    %41 = arith.addf %40, %39 : vector<22x48xf32>
    %42 = arith.divf %40, %41 : vector<22x48xf32>
    %43 = arith.mulf %35, %42 : vector<22x48xf32>
    %44 = arith.subi %6, %0 : i32
    %c6_i32 = arith.constant 6 : i32
    %45 = arith.addi %44, %c6_i32 : i32
    %46 = arith.index_cast %45 : i32 to index
    %c0_20 = arith.constant 0 : index
    %47 = vector.load %arg12[%46, %c0_20] : memref<28x48xf32, #tpu.memory_space<vmem>>, vector<22x48xf32>
    tpu.vector_store %arg12[%46, %c0_20], %43 {strides = array<i32>} : memref<28x48xf32, #tpu.memory_space<vmem>>, vector<22x48xf32>,
    %c0_21 = arith.constant 0 : index
    %c0_22 = arith.constant 0 : index
    %48 = vector.load %arg7[%c0_21, %c0_22] : memref<7x48xf32, #tpu.memory_space<vmem>>, vector<7x48xf32>
    %cst_23 = arith.constant 0.000000e+00 : f32
    %49 = vector.broadcast %cst_23 : f32 to vector<16x48xf32>
    %c3 = arith.constant 3 : index
    %c0_24 = arith.constant 0 : index
    %50 = vector.load %arg12[%c3, %c0_24] : memref<28x48xf32, #tpu.memory_space<vmem>>, vector<16x48xf32>
    %51 = vector.extract_strided_slice %48 {offsets = [0, 0], sizes = [1, 48], strides = [1, 1]} : vector<7x48xf32> to vector<1x48xf32>
    %52 = vector.broadcast %51 : vector<1x48xf32> to vector<16x48xf32>
    %53 = arith.mulf %50, %52 : vector<16x48xf32>
    %54 = arith.addf %49, %53 : vector<16x48xf32>
    %c4 = arith.constant 4 : index
    %c0_25 = arith.constant 0 : index
    %55 = vector.load %arg12[%c4, %c0_25] : memref<28x48xf32, #tpu.memory_space<vmem>>, vector<16x48xf32>
    %56 = vector.extract_strided_slice %48 {offsets = [1, 0], sizes = [1, 48], strides = [1, 1]} : vector<7x48xf32> to vector<1x48xf32>
    %57 = vector.broadcast %56 : vector<1x48xf32> to vector<16x48xf32>
    %58 = arith.mulf %55, %57 : vector<16x48xf32>
    %59 = arith.addf %54, %58 : vector<16x48xf32>
    %c5 = arith.constant 5 : index
    %c0_26 = arith.constant 0 : index
    %60 = vector.load %arg12[%c5, %c0_26] : memref<28x48xf32, #tpu.memory_space<vmem>>, vector<16x48xf32>
    %61 = vector.extract_strided_slice %48 {offsets = [2, 0], sizes = [1, 48], strides = [1, 1]} : vector<7x48xf32> to vector<1x48xf32>
    %62 = vector.broadcast %61 : vector<1x48xf32> to vector<16x48xf32>
    %63 = arith.mulf %60, %62 : vector<16x48xf32>
    %64 = arith.addf %59, %63 : vector<16x48xf32>
    %c6 = arith.constant 6 : index
    %c0_27 = arith.constant 0 : index
    %65 = vector.load %arg12[%c6, %c0_27] : memref<28x48xf32, #tpu.memory_space<vmem>>, vector<16x48xf32>
    %66 = vector.extract_strided_slice %48 {offsets = [3, 0], sizes = [1, 48], strides = [1, 1]} : vector<7x48xf32> to vector<1x48xf32>
    %67 = vector.broadcast %66 : vector<1x48xf32> to vector<16x48xf32>
    %68 = arith.mulf %65, %67 : vector<16x48xf32>
    %69 = arith.addf %64, %68 : vector<16x48xf32>
    %c7 = arith.constant 7 : index
    %c0_28 = arith.constant 0 : index
    %70 = vector.load %arg12[%c7, %c0_28] : memref<28x48xf32, #tpu.memory_space<vmem>>, vector<16x48xf32>
    %71 = vector.extract_strided_slice %48 {offsets = [4, 0], sizes = [1, 48], strides = [1, 1]} : vector<7x48xf32> to vector<1x48xf32>
    %72 = vector.broadcast %71 : vector<1x48xf32> to vector<16x48xf32>
    %73 = arith.mulf %70, %72 : vector<16x48xf32>
    %74 = arith.addf %69, %73 : vector<16x48xf32>
    %c8 = arith.constant 8 : index
    %c0_29 = arith.constant 0 : index
    %75 = vector.load %arg12[%c8, %c0_29] : memref<28x48xf32, #tpu.memory_space<vmem>>, vector<16x48xf32>
    %76 = vector.extract_strided_slice %48 {offsets = [5, 0], sizes = [1, 48], strides = [1, 1]} : vector<7x48xf32> to vector<1x48xf32>
    %77 = vector.broadcast %76 : vector<1x48xf32> to vector<16x48xf32>
    %78 = arith.mulf %75, %77 : vector<16x48xf32>
    %79 = arith.addf %74, %78 : vector<16x48xf32>
    %c9 = arith.constant 9 : index
    %c0_30 = arith.constant 0 : index
    %80 = vector.load %arg12[%c9, %c0_30] : memref<28x48xf32, #tpu.memory_space<vmem>>, vector<16x48xf32>
    %81 = vector.extract_strided_slice %48 {offsets = [6, 0], sizes = [1, 48], strides = [1, 1]} : vector<7x48xf32> to vector<1x48xf32>
    %82 = vector.broadcast %81 : vector<1x48xf32> to vector<16x48xf32>
    %83 = arith.mulf %80, %82 : vector<16x48xf32>
    %84 = arith.addf %79, %83 : vector<16x48xf32>
    %c0_31 = arith.constant 0 : index
    %c0_32 = arith.constant 0 : index
    %85 = vector.load %arg8[%c0_31, %c0_32] : memref<1x48xf32, #tpu.memory_space<vmem>>, vector<1x48xf32>
    %86 = vector.broadcast %85 : vector<1x48xf32> to vector<16x48xf32>
    %87 = arith.mulf %84, %86 : vector<16x48xf32>
    %c0_33 = arith.constant 0 : index
    %c0_34 = arith.constant 0 : index
    %88 = vector.load %arg9[%c0_33, %c0_34] : memref<1x48xf32, #tpu.memory_space<vmem>>, vector<1x48xf32>
    %89 = vector.broadcast %88 : vector<1x48xf32> to vector<16x48xf32>
    %90 = arith.addf %87, %89 : vector<16x48xf32>
    %91 = arith.negf %90 : vector<16x48xf32>
    %92 = math.exp %91 : vector<16x48xf32>
    %cst_35 = arith.constant 1.000000e+00 : f32
    %93 = vector.broadcast %cst_35 : f32 to vector<16x48xf32>
    %94 = arith.addf %93, %92 : vector<16x48xf32>
    %95 = arith.divf %93, %94 : vector<16x48xf32>
    %96 = arith.mulf %90, %95 : vector<16x48xf32>
    %c0_36 = arith.constant 0 : index
    %c0_37 = arith.constant 0 : index
    %97 = vector.load %arg10[%c0_36, %c0_37] : memref<48x32xf32, #tpu.memory_space<vmem>>, vector<48x32xf32>
    %cst_38 = arith.constant dense<0.000000e+00> : vector<16x32xf32>
    %98 = tpu.matmul %96, %97, %cst_38 {dimension_numbers = #tpu.dot_dimension_numbers<[1], [0], [0], [1], [0, 0, 1, 1], [], []>} : vector<16x48xf32>, vector<48x32xf32>, vector<16x32xf32> -> vector<16x32xf32>
    %c0_39 = arith.constant 0 : index
    %c0_40 = arith.constant 0 : index
    %c0_41 = arith.constant 0 : index
    %99 = vector.load %arg11[%c0_39, %c0_40, %c0_41] : memref<1x16x32xf32, #tpu.memory_space<vmem>>, vector<1x16x32xf32>
    %100 = vector.shape_cast %99 : vector<1x16x32xf32> to vector<16x32xf32>
    %101 = vector.shape_cast %98 : vector<16x32xf32> to vector<1x16x32xf32>
    tpu.vector_store %arg11[%c0_39, %c0_40, %c0_41], %101 {strides = array<i32>} : memref<1x16x32xf32, #tpu.memory_space<vmem>>, vector<1x16x32xf32>,
    return
  }
  func.func @transform_0(%arg0: i32, %arg1: i32) -> (i32, i32, i32) {
    %c0_i32 = arith.constant 0 : i32
    %c0_i32_0 = arith.constant 0 : i32
    %c0_i32_1 = arith.constant 0 : i32
    return %arg0, %c0_i32, %c0_i32_0 : i32, i32, i32
  }
  func.func @transform_1(%arg0: i32, %arg1: i32) -> (i32, i32) {
    %c0_i32 = arith.constant 0 : i32
    %c0_i32_0 = arith.constant 0 : i32
    %c0_i32_1 = arith.constant 0 : i32
    return %c0_i32, %c0_i32_0 : i32, i32
  }
  func.func @transform_2(%arg0: i32, %arg1: i32) -> (i32, i32) {
    %c0_i32 = arith.constant 0 : i32
    %c0_i32_0 = arith.constant 0 : i32
    %c0_i32_1 = arith.constant 0 : i32
    return %c0_i32, %c0_i32_0 : i32, i32
  }
  func.func @transform_3(%arg0: i32, %arg1: i32) -> (i32, i32) {
    %c0_i32 = arith.constant 0 : i32
    %c0_i32_0 = arith.constant 0 : i32
    %c0_i32_1 = arith.constant 0 : i32
    return %c0_i32, %c0_i32_0 : i32, i32
  }
  func.func @transform_4(%arg0: i32, %arg1: i32) -> (i32, i32) {
    %c0_i32 = arith.constant 0 : i32
    %c0_i32_0 = arith.constant 0 : i32
    %c0_i32_1 = arith.constant 0 : i32
    return %c0_i32, %c0_i32_0 : i32, i32
  }
  func.func @transform_5(%arg0: i32, %arg1: i32) -> (i32, i32) {
    %c0_i32 = arith.constant 0 : i32
    %c0_i32_0 = arith.constant 0 : i32
    %c0_i32_1 = arith.constant 0 : i32
    return %c0_i32, %c0_i32_0 : i32, i32
  }
  func.func @transform_6(%arg0: i32, %arg1: i32) -> (i32, i32) {
    %c0_i32 = arith.constant 0 : i32
    %c0_i32_0 = arith.constant 0 : i32
    %c0_i32_1 = arith.constant 0 : i32
    return %c0_i32, %c0_i32_0 : i32, i32
  }
  func.func @transform_7(%arg0: i32, %arg1: i32) -> (i32, i32) {
    %c0_i32 = arith.constant 0 : i32
    %c0_i32_0 = arith.constant 0 : i32
    %c0_i32_1 = arith.constant 0 : i32
    return %c0_i32, %c0_i32_0 : i32, i32
  }
  func.func @transform_8(%arg0: i32, %arg1: i32) -> (i32, i32) {
    %c0_i32 = arith.constant 0 : i32
    %c0_i32_0 = arith.constant 0 : i32
    %c0_i32_1 = arith.constant 0 : i32
    return %c0_i32, %c0_i32_0 : i32, i32
  }
  func.func @transform_9(%arg0: i32, %arg1: i32) -> (i32, i32, i32) {
    %c0_i32 = arith.constant 0 : i32
    %c0_i32_0 = arith.constant 0 : i32
    return %arg0, %arg1, %c0_i32 : i32, i32, i32
  }
}

</mosaic_0001>

<llo_original>
// kernel: tpu_custom_call.1
$region0: #{tpu_custom_call.1}
  #allocation0 [shape = 'u32[]', space=smem, size = 0x4, offset = 0x4, fixed_abs, tag = 'smem constant byte address 0x4 - core index']
  #allocation1 [shape = 'u32[72,128]{1,0:T(1,128)}', space=vmem, size = 0x9000, scoped, tag = 'internal scratch']
  #allocation2 [shape = 'f32[28,48]{1,0:T(8,128)}', space=vmem, size = 0x4000, scoped, tag = 'scratch operand']
  %s0 = inlined_call_operand.vmem [shape: f32[2,32,32], index: 0, kind: input, shape index: {}]
  %s1 = inlined_call_operand.vmem [shape: f32[1,32], index: 1, kind: input, shape index: {}]
  %s2 = inlined_call_operand.vmem [shape: f32[1,32], index: 2, kind: input, shape index: {}]
  %s3 = inlined_call_operand.hbm [shape: f32[32,48], index: 3, kind: input, shape index: {}]
  %s4 = inlined_call_operand.hbm [shape: f32[32,48], index: 4, kind: input, shape index: {}]
  %s5 = inlined_call_operand.vmem [shape: f32[7,48], index: 5, kind: input, shape index: {}]
  %s6 = inlined_call_operand.vmem [shape: f32[1,48], index: 6, kind: input, shape index: {}]
  %s7 = inlined_call_operand.vmem [shape: f32[1,48], index: 7, kind: input, shape index: {}]
  %s8 = inlined_call_operand.vmem [shape: f32[48,32], index: 8, kind: input, shape index: {}]
  %s9 = inlined_call_operand.hbm [shape: f32[2,32,32], index: 9, kind: output, shape index: {}]
  %s10 = sld [smem:[#allocation0]]
  $region77: #{tpu_custom_call.1} parent=0
    _
  %s12 = ssub.s32 1, %s10
  %s13 = scalar_select 0, %s12, %s10
  $region1: #{tpu_custom_call.1} parent=0
    #allocation3 [shape = 'u8[16384]{0}', space=vmem, size = 0x4000, scoped, tag = 'input window, operand 3, single buffered']
    #allocation4 [shape = 's32[2]{0}', space=sflag, size = 0x8, scoped, tag = 'scoped memory for tpu_custom_call.1']
    #allocation5 [shape = 's32[2]{0}', space=sflag, size = 0x8, scoped, tag = 'scoped memory for tpu_custom_call.1']
    #allocation6 [shape = 'u8[16384]{0}', space=vmem, size = 0x4000, scoped, tag = 'input window, operand 4, single buffered']
    #allocation7 [shape = 's32[1]{0}', space=sflag, size = 0x4, scoped, tag = 'scoped memory for tpu_custom_call.1']
    #allocation8 [shape = 'u8[16384]{0}', space=vmem, size = 0x4000, scoped, tag = 'output window, operand 0']
    %14 = vsyncpa [#allocation4], 0
    %15 = vsyncpa [#allocation7], 0
    %16 = vsyncpa [#allocation5], 0
    %s17 = scalar_lea.sflag [#allocation5], 1
    %18 = vsyncpa %s17, 0
    loop: start=0, step=1, limit=6
    $region2: #{tpu_custom_call.1} parent=1 // loop_pre_header
      _
    $region3: #{tpu_custom_call.1} parent=1 // loop_header
      %s20 = sphi 0, %s24
      %p21 = scmp.ge.s32.totalorder %s20, 6
      %s27 = sphi 0, %s39
      %s28 = sphi 0, %s35
      %s29 = sphi 0, %s27
      %s30 = sphi 0, %s28
      %s31 = sphi 0, %s29
      %s32 = sphi 0, %s30
      %s42 = sphi 0, %s44
      %s45 = sphi 0, %s42
      %s46 = sphi 0, %s45
      %s62 = sphi 0, %s46
      %s66 = sphi 0, %s66
      %s68 = sphi 0, %s66
      %s69 = sphi 0, %s68
      %s83 = sphi 0, %s69
      %s87 = sphi 0, %s87
      %s89 = sphi 0, %s87
      %s90 = sphi 0, %s89
      %s104 = sphi 0, %s90
      %s108 = sphi 0, %s108
      %s110 = sphi 0, %s108
      %s111 = sphi 0, %s110
      %s125 = sphi 0, %s111
      %s129 = sphi 0, %s129
      %s131 = sphi 0, %s129
      %s132 = sphi 0, %s131
      %s146 = sphi 0, %s132
      %s150 = sphi 0, %s150
      %s152 = sphi 0, %s150
      %s153 = sphi 0, %s152
      %s167 = sphi 0, %s153
      %s171 = sphi 0, %s171
      %s173 = sphi 0, %s171
      %s174 = sphi 0, %s173
      %s188 = sphi 0, %s174
      %s192 = sphi 0, %s192
      %s194 = sphi 0, %s192
      %s195 = sphi 0, %s194
      %s209 = sphi 0, %s195
      %s213 = sphi 0, %s213
      %s215 = sphi 0, %s213
      %s216 = sphi 0, %s215
      %s230 = sphi 0, %s216
      %s238 = sphi 0, %s240
      %s241 = sphi 0, %s238
      %s242 = sphi 0, %s241
      %s258 = sphi 0, %s242
    $region4: #{tpu_custom_call.1} parent=1 // loop_header_branch
      %23 = sbr.rel (%p21) target = $region8
    $region5: #{tpu_custom_call.1} parent=1 // loop_body
      %s25 = ssub.s32 %s20, 1
      %s26 = ssub.s32 %s20, 2
      %s33 = sadd.s32 1, %s28
      %p34 = scmp.ge.s32.totalorder %s33, 2
      %s35 = scalar_select %p34, 0, %s33
      %s36 = sadd.s32 1, %s27
      %s37 = scalar_select %p34, %s36, %s27
      %p38 = scmp.ge.s32.totalorder %s37, 2
      %s39 = scalar_select %p38, 0, %s37
      %s40 = ssub.s32 %s27, %s39
      %p41 = scmp.eq.s32.totalorder %s40, 0
      %s43 = sadd.s32 %s42, 1
      %s44 = scalar_select %p41, %s42, %s43
      %p47 = pneg %p41
      %p48 = scmp.eq.s32.totalorder %s20, 3
      %p49 = por %p47, %p48
      %p50 = scmp.ne.s32.totalorder %s42, %s45
      %p51 = scmp.eq.s32.totalorder %s20, 0
      %p52 = por %p50, %p51
      %p53 = scmp.ne.s32.totalorder %s42, %s45
      %p54 = scmp.eq.s32.totalorder %s25, 3
      %p55 = por %p53, %p54
      %p56 = scmp.ne.s32.totalorder %s45, %s46
      %p57 = scmp.eq.s32.totalorder %s25, 0
      %p58 = por %p56, %p57
      %p59 = scmp.ne.s32.totalorder %s45, %s46
      %p60 = scmp.eq.s32.totalorder %s26, 3
      %p61 = por %p59, %p60
      %p63 = scmp.ne.s32.totalorder %s46, %s62
      %p64 = scmp.eq.s32.totalorder %s26, 0
      %p65 = por %p63, %p64
      %s67 = sadd.s32 %s66, 1
      %p70 = scmp.eq.s32.totalorder %s20, 3
      %p71 = scmp.ne.s32.totalorder %s66, %s68
      %p72 = scmp.eq.s32.totalorder %s20, 0
      %p73 = por %p71, %p72
      %p74 = scmp.ne.s32.totalorder %s66, %s68
      %p75 = scmp.eq.s32.totalorder %s25, 3
      %p76 = por %p74, %p75
      %p77 = scmp.ne.s32.totalorder %s68, %s69
      %p78 = scmp.eq.s32.totalorder %s25, 0
      %p79 = por %p77, %p78
      %p80 = scmp.ne.s32.totalorder %s68, %s69
      %p81 = scmp.eq.s32.totalorder %s26, 3
      %p82 = por %p80, %p81
      %p84 = scmp.ne.s32.totalorder %s69, %s83
      %p85 = scmp.eq.s32.totalorder %s26, 0
      %p86 = por %p84, %p85
      %s88 = sadd.s32 %s87, 1
      %p91 = scmp.eq.s32.totalorder %s20, 3
      %p92 = scmp.ne.s32.totalorder %s87, %s89
      %p93 = scmp.eq.s32.totalorder %s20, 0
      %p94 = por %p92, %p93
      %p95 = scmp.ne.s32.totalorder %s87, %s89
      %p96 = scmp.eq.s32.totalorder %s25, 3
      %p97 = por %p95, %p96
      %p98 = scmp.ne.s32.totalorder %s89, %s90
      %p99 = scmp.eq.s32.totalorder %s25, 0
      %p100 = por %p98, %p99
      %p101 = scmp.ne.s32.totalorder %s89, %s90
      %p102 = scmp.eq.s32.totalorder %s26, 3
      %p103 = por %p101, %p102
      %p105 = scmp.ne.s32.totalorder %s90, %s104
      %p106 = scmp.eq.s32.totalorder %s26, 0
      %p107 = por %p105, %p106
      %s109 = sadd.s32 %s108, 1
      %p112 = scmp.eq.s32.totalorder %s20, 3
      %p113 = scmp.ne.s32.totalorder %s108, %s110
      %p114 = scmp.eq.s32.totalorder %s20, 0
      %p115 = por %p113, %p114
      %p116 = scmp.ne.s32.totalorder %s108, %s110
      %p117 = scmp.eq.s32.totalorder %s25, 3
      %p118 = por %p116, %p117
      %p119 = scmp.ne.s32.totalorder %s110, %s111
      %p120 = scmp.eq.s32.totalorder %s25, 0
      %p121 = por %p119, %p120
      %p122 = scmp.ne.s32.totalorder %s110, %s111
      %p123 = scmp.eq.s32.totalorder %s26, 3
      %p124 = por %p122, %p123
      %p126 = scmp.ne.s32.totalorder %s111, %s125
      %p127 = scmp.eq.s32.totalorder %s26, 0
      %p128 = por %p126, %p127
      %s130 = sadd.s32 %s129, 1
      %p133 = scmp.eq.s32.totalorder %s20, 3
      %p134 = scmp.ne.s32.totalorder %s129, %s131
      %p135 = scmp.eq.s32.totalorder %s20, 0
      %p136 = por %p134, %p135
      %p137 = scmp.ne.s32.totalorder %s129, %s131
      %p138 = scmp.eq.s32.totalorder %s25, 3
      %p139 = por %p137, %p138
      %p140 = scmp.ne.s32.totalorder %s131, %s132
      %p141 = scmp.eq.s32.totalorder %s25, 0
      %p142 = por %p140, %p141
      %p143 = scmp.ne.s32.totalorder %s131, %s132
      %p144 = scmp.eq.s32.totalorder %s26, 3
      %p145 = por %p143, %p144
      %p147 = scmp.ne.s32.totalorder %s132, %s146
      %p148 = scmp.eq.s32.totalorder %s26, 0
      %p149 = por %p147, %p148
      %s151 = sadd.s32 %s150, 1
      %p154 = scmp.eq.s32.totalorder %s20, 3
      %p155 = scmp.ne.s32.totalorder %s150, %s152
      %p156 = scmp.eq.s32.totalorder %s20, 0
      %p157 = por %p155, %p156
      %p158 = scmp.ne.s32.totalorder %s150, %s152
      %p159 = scmp.eq.s32.totalorder %s25, 3
      %p160 = por %p158, %p159
      %p161 = scmp.ne.s32.totalorder %s152, %s153
      %p162 = scmp.eq.s32.totalorder %s25, 0
      %p163 = por %p161, %p162
      %p164 = scmp.ne.s32.totalorder %s152, %s153
      %p165 = scmp.eq.s32.totalorder %s26, 3
      %p166 = por %p164, %p165
      %p168 = scmp.ne.s32.totalorder %s153, %s167
      %p169 = scmp.eq.s32.totalorder %s26, 0
      %p170 = por %p168, %p169
      %s172 = sadd.s32 %s171, 1
      %p175 = scmp.eq.s32.totalorder %s20, 3
      %p176 = scmp.ne.s32.totalorder %s171, %s173
      %p177 = scmp.eq.s32.totalorder %s20, 0
      %p178 = por %p176, %p177
      %p179 = scmp.ne.s32.totalorder %s171, %s173
      %p180 = scmp.eq.s32.totalorder %s25, 3
      %p181 = por %p179, %p180
      %p182 = scmp.ne.s32.totalorder %s173, %s174
      %p183 = scmp.eq.s32.totalorder %s25, 0
      %p184 = por %p182, %p183
      %p185 = scmp.ne.s32.totalorder %s173, %s174
      %p186 = scmp.eq.s32.totalorder %s26, 3
      %p187 = por %p185, %p186
      %p189 = scmp.ne.s32.totalorder %s174, %s188
      %p190 = scmp.eq.s32.totalorder %s26, 0
      %p191 = por %p189, %p190
      %s193 = sadd.s32 %s192, 1
      %p196 = scmp.eq.s32.totalorder %s20, 3
      %p197 = scmp.ne.s32.totalorder %s192, %s194
      %p198 = scmp.eq.s32.totalorder %s20, 0
      %p199 = por %p197, %p198
      %p200 = scmp.ne.s32.totalorder %s192, %s194
      %p201 = scmp.eq.s32.totalorder %s25, 3
      %p202 = por %p200, %p201
      %p203 = scmp.ne.s32.totalorder %s194, %s195
      %p204 = scmp.eq.s32.totalorder %s25, 0
      %p205 = por %p203, %p204
      %p206 = scmp.ne.s32.totalorder %s194, %s195
      %p207 = scmp.eq.s32.totalorder %s26, 3
      %p208 = por %p206, %p207
      %p210 = scmp.ne.s32.totalorder %s195, %s209
      %p211 = scmp.eq.s32.totalorder %s26, 0
      %p212 = por %p210, %p211
      %s214 = sadd.s32 %s213, 1
      %p217 = scmp.eq.s32.totalorder %s20, 3
      %p218 = scmp.ne.s32.totalorder %s213, %s215
      %p219 = scmp.eq.s32.totalorder %s20, 0
      %p220 = por %p218, %p219
      %p221 = scmp.ne.s32.totalorder %s213, %s215
      %p222 = scmp.eq.s32.totalorder %s25, 3
      %p223 = por %p221, %p222
      %p224 = scmp.ne.s32.totalorder %s215, %s216
      %p225 = scmp.eq.s32.totalorder %s25, 0
      %p226 = por %p224, %p225
      %p227 = scmp.ne.s32.totalorder %s215, %s216
      %p228 = scmp.eq.s32.totalorder %s26, 3
      %p229 = por %p227, %p228
      %p231 = scmp.ne.s32.totalorder %s216, %s230
      %p232 = scmp.eq.s32.totalorder %s26, 0
      %p233 = por %p231, %p232
      %s234 = ssub.s32 %s27, %s39
      %s235 = ssub.s32 %s28, %s35
      %s236 = sor.u32 %s234, %s235
      %p237 = scmp.eq.s32.totalorder %s236, 0
      %s239 = sadd.s32 %s238, 1
      %s240 = scalar_select %p237, %s238, %s239
      %p243 = pneg %p237
      %p244 = scmp.eq.s32.totalorder %s20, 3
      %p245 = por %p243, %p244
      %p246 = scmp.ne.s32.totalorder %s238, %s241
      %p247 = scmp.eq.s32.totalorder %s20, 0
      %p248 = por %p246, %p247
      %p249 = scmp.ne.s32.totalorder %s238, %s241
      %p250 = scmp.eq.s32.totalorder %s25, 3
      %p251 = por %p249, %p250
      %p252 = scmp.ne.s32.totalorder %s241, %s242
      %p253 = scmp.eq.s32.totalorder %s25, 0
      %p254 = por %p252, %p253
      %p255 = scmp.ne.s32.totalorder %s241, %s242
      %p256 = scmp.eq.s32.totalorder %s26, 3
      %p257 = por %p255, %p256
      %p259 = scmp.ne.s32.totalorder %s242, %s258
      %p260 = scmp.eq.s32.totalorder %s26, 0
      %p261 = por %p259, %p260
      %p262 = scmp.le.s32.totalorder 1, %s20
      %p263 = scmp.lt.s32.totalorder %s20, 5
      %p264 = pnand %p262, %p263
      %p265 = pneg %p264
      // Predicated region
      $region9: #{tpu_custom_call.1} parent=5 // pred_check
        _
      $region10: #{tpu_custom_call.1} parent=5 // pred_check_branch
        %267 = sbr.rel (%p264) target = $region12
      $region11: #{tpu_custom_call.1} parent=5 // pred_region
        %s268 = ssub.s32 %s20, 1
        // Predicated region
        $region13: #{tpu_custom_call.1} parent=11 // pred_check
          %p269 = pneg %p79
        $region14: #{tpu_custom_call.1} parent=11 // pred_check_branch
          %271 = sbr.rel (%p269) target = $region16
        $region15: #{tpu_custom_call.1} parent=11 // pred_region
          _
        $region16: #{tpu_custom_call.1} parent=11 // pred_fallthru
          _
        // Predicated region
        $region17: #{tpu_custom_call.1} parent=11 // pred_check
          %p272 = pneg %p100
        $region18: #{tpu_custom_call.1} parent=11 // pred_check_branch
          %274 = sbr.rel (%p272) target = $region20
        $region19: #{tpu_custom_call.1} parent=11 // pred_region
          _
        $region20: #{tpu_custom_call.1} parent=11 // pred_fallthru
          _
        // Predicated region
        $region21: #{tpu_custom_call.1} parent=11 // pred_check
          %p275 = pneg %p121
        $region22: #{tpu_custom_call.1} parent=11 // pred_check_branch
          %277 = sbr.rel (%p275) target = $region24
        $region23: #{tpu_custom_call.1} parent=11 // pred_region
          %279 = vsyncadd [#allocation4], 0
          %s280 = sshll.u32 %s3, 4
          %s281 = int_to_ptr.hbm [resolvable:$true] %s280
          %s282 = sshll.u32 [#allocation3], 4
          %s283 = int_to_ptr.vmem [resolvable:$true] %s282
          %288 = dma.hbm_to_vmem [thread:$0]  %s281, 512, %s283, [#allocation4], 128, 128, 8
        $region24: #{tpu_custom_call.1} parent=11 // pred_fallthru
          _
        // Predicated region
        $region25: #{tpu_custom_call.1} parent=11 // pred_check
          %p289 = pneg %p142
        $region26: #{tpu_custom_call.1} parent=11 // pred_check_branch
          %291 = sbr.rel (%p289) target = $region28
        $region27: #{tpu_custom_call.1} parent=11 // pred_region
          %293 = vsyncadd [#allocation7], 0
          %s294 = sshll.u32 %s4, 4
          %s295 = int_to_ptr.hbm [resolvable:$true] %s294
          %s296 = sshll.u32 [#allocation6], 4
          %s297 = int_to_ptr.vmem [resolvable:$true] %s296
          %302 = dma.hbm_to_vmem [thread:$0]  %s295, 512, %s297, [#allocation7], 128, 128, 8
        $region28: #{tpu_custom_call.1} parent=11 // pred_fallthru
          _
        // Predicated region
        $region29: #{tpu_custom_call.1} parent=11 // pred_check
          %p303 = pneg %p163
        $region30: #{tpu_custom_call.1} parent=11 // pred_check_branch
          %305 = sbr.rel (%p303) target = $region32
        $region31: #{tpu_custom_call.1} parent=11 // pred_region
          _
        $region32: #{tpu_custom_call.1} parent=11 // pred_fallthru
          _
        // Predicated region
        $region33: #{tpu_custom_call.1} parent=11 // pred_check
          %p306 = pneg %p184
        $region34: #{tpu_custom_call.1} parent=11 // pred_check_branch
          %308 = sbr.rel (%p306) target = $region36
        $region35: #{tpu_custom_call.1} parent=11 // pred_region
          _
        $region36: #{tpu_custom_call.1} parent=11 // pred_fallthru
          _
        // Predicated region
        $region37: #{tpu_custom_call.1} parent=11 // pred_check
          %p309 = pneg %p205
        $region38: #{tpu_custom_call.1} parent=11 // pred_check_branch
          %311 = sbr.rel (%p309) target = $region40
        $region39: #{tpu_custom_call.1} parent=11 // pred_region
          _
        $region40: #{tpu_custom_call.1} parent=11 // pred_fallthru
          _
        // Predicated region
        $region41: #{tpu_custom_call.1} parent=11 // pred_check
          %p312 = pneg %p226
        $region42: #{tpu_custom_call.1} parent=11 // pred_check_branch
          %314 = sbr.rel (%p312) target = $region44
        $region43: #{tpu_custom_call.1} parent=11 // pred_region
          _
        $region44: #{tpu_custom_call.1} parent=11 // pred_fallthru
          _
      $region12: #{tpu_custom_call.1} parent=5 // pred_fallthru
        _
      %p315 = scmp.lt.s32.totalorder %s20, 4
      // Predicated region
      $region45: #{tpu_custom_call.1} parent=5 // pred_check
        %p316 = pneg %p315
      $region46: #{tpu_custom_call.1} parent=5 // pred_check_branch
        %318 = sbr.rel (%p316) target = $region48
      $region47: #{tpu_custom_call.1} parent=5 // pred_region
        // Predicated region
        $region49: #{tpu_custom_call.1} parent=47 // pred_check
          %p319 = pneg %p52
        $region50: #{tpu_custom_call.1} parent=47 // pred_check_branch
          %321 = sbr.rel (%p319) target = $region52
        $region51: #{tpu_custom_call.1} parent=47 // pred_region
          %p322 = scmp.lt.s32.totalorder %s27, 1
          %s323 = scalar_select %p322, %s27, 1
          %s324 = smul.addr %s323, 4
          %s325 = smul.addr %s324, 8
          %s326 = scalar_lea.vmem %s0, %s325
        $region52: #{tpu_custom_call.1} parent=47 // pred_fallthru
          _
      $region48: #{tpu_custom_call.1} parent=5 // pred_fallthru
        _
      %p327 = scmp.le.s32.totalorder 1, %s20
      %p328 = scmp.lt.s32.totalorder %s20, 5
      %p329 = pnand %p327, %p328
      %p330 = pneg %p329
      // Predicated region
      $region53: #{tpu_custom_call.1} parent=5 // pred_check
        _
      $region54: #{tpu_custom_call.1} parent=5 // pred_check_branch
        %332 = sbr.rel (%p329) target = $region56
      $region55: #{tpu_custom_call.1} parent=5 // pred_region
        %s333 = ssub.s32 %s20, 1
        // Predicated region
        $region57: #{tpu_custom_call.1} parent=55 // pred_check
          %p334 = pneg %p121
        $region58: #{tpu_custom_call.1} parent=55 // pred_check_branch
          %336 = sbr.rel (%p334) target = $region60
        $region59: #{tpu_custom_call.1} parent=55 // pred_region
          %338 = dma.done [#allocation4], 512
        $region60: #{tpu_custom_call.1} parent=55 // pred_fallthru
          _
        // Predicated region
        $region61: #{tpu_custom_call.1} parent=55 // pred_check
          %p339 = pneg %p142
        $region62: #{tpu_custom_call.1} parent=55 // pred_check_branch
          %341 = sbr.rel (%p339) target = $region64
        $region63: #{tpu_custom_call.1} parent=55 // pred_region
          %343 = dma.done [#allocation7], 512
        $region64: #{tpu_custom_call.1} parent=55 // pred_fallthru
          _
        %p344 = scmp.lt.s32.totalorder %s29, 1
        %s345 = scalar_select %p344, %s29, 1
        %s346 = smul.addr %s345, 4
        %s347 = smul.addr %s346, 8
        %s348 = scalar_lea.vmem %s0, %s347
        %p349 = pneg %p58
        %p350 = pneg %p55
        %p351 = pneg %p79
        %p352 = pneg %p76
        %p353 = pneg %p100
        %p354 = pneg %p97
        %p355 = pneg %p121
        %p356 = pneg %p118
        %p357 = pneg %p142
        %p358 = pneg %p139
        %p359 = pneg %p163
        %p360 = pneg %p160
        %p361 = pneg %p184
        %p362 = pneg %p181
        %p363 = pneg %p205
        %p364 = pneg %p202
        %p365 = pneg %p226
        %p366 = pneg %p223
        %p367 = pneg %p254
        %p368 = pneg %p251
        %s369 = sand.u32 %s241, 1
        %s370 = scalar_lea.sflag [#allocation5], %s369
        %s371 = sand.u32 %s241, 1
        %s372 = smul.addr %s371, 16
        %s373 = scalar_lea.vmem [#allocation8], %s372
        %p374 = scmp.lt.s32.totalorder %s29, 1
        %s375 = scalar_select %p374, %s29, 1
        %s376 = smul.addr %s375, 4
        %s377 = smul.addr %s376, 8
        %s378 = scalar_lea.vmem %s0, %s377
        %s379 = smul.u32 2, %s30
        %s380 = smul.u32 %s30, 16
        %vm381 = vcmask 390144
        %382 = vst.msk [vmem:[#allocation2] sm:$0x3f] %vm381, 0.0
        %383 = vst.msk [vmem:[#allocation2 + $0x16] sm:$0x3f] %vm381, 0.0
        %s384 = ssub.s32 %s380, 3
        %p385 = scmp.gt.s32.totalorder %s384, 0
        %s386 = scalar_select %p385, %s384, 0
        %p387 = scmp.lt.s32.totalorder %s386, 10
        %s388 = scalar_select %p387, %s386, 10
        %s389 = scalar_lea.vmem %s378, %s388
        %v390 = vld [vmem:[%s389] sm:$0xff]
        %v391 = vld [vmem:[%s389 + $0x8] sm:$0xff]
        %v392 = vld [vmem:[%s389 + $0x10] sm:$0x3f]
        %v393 = vld [vmem:[%s1] sm:$0x1]
        %v394 = vld [vmem:[%s2] sm:$0x1]
        %vm395 = vcmask 261120
        %v396 = vsel %vm395, %v390, 0.0
        %397 = vadd.xlane.f32.xlu0 %v396
        %v398 = vpop.xlane.xlu0 %397
        %v399 = vsel %vm395, %v391, 0.0
        %400 = vadd.xlane.f32.xlu0 %v399
        %v401 = vpop.xlane.xlu0 %400
        %vm402 = vcmask 259072
        %v403 = vsel %vm402, %v392, 0.0
        %404 = vadd.xlane.f32.xlu0 %v403
        %v405 = vpop.xlane.xlu0 %404
        %v406 = vrcp.pop 32.0
        %v407 = vmul.f32 32.0, %v406
        %v408 = vsub.f32 1.0, %v407
        %v409 = vmul.f32 %v406, %v408
        %v410 = vadd.f32 %v406, %v409
        %vm411 = vweird.f32 %v406
        %v412 = vsel %vm411, %v406, %v410
        %v413 = vmul.f32 %v398, %v412
        %v414 = vmul.f32 %v401, %v412
        %v415 = vmul.f32 %v405, %v412
        %v416 = vsub.f32 %v390, %v413
        %v417 = vsub.f32 %v391, %v414
        %v418 = vsub.f32 %v392, %v415
        %v419 = vmul.f32 %v416, %v416
        %v420 = vmul.f32 %v417, %v417
        %v421 = vmul.f32 %v418, %v418
        %v422 = vsel %vm395, %v419, 0.0
        %423 = vadd.xlane.f32.xlu0 %v422
        %v424 = vpop.xlane.xlu0 %423
        %v425 = vsel %vm395, %v420, 0.0
        %426 = vadd.xlane.f32.xlu0 %v425
        %v427 = vpop.xlane.xlu0 %426
        %v428 = vsel %vm402, %v421, 0.0
        %429 = vadd.xlane.f32.xlu0 %v428
        %v430 = vpop.xlane.xlu0 %429
        %v431 = vmul.f32 %v424, %v412
        %v432 = vmul.f32 %v427, %v412
        %v433 = vmul.f32 %v430, %v412
        %v434 = vadd.f32 %v431, 1e-05
        %v435 = vadd.f32 %v432, 1e-05
        %v436 = vadd.f32 %v433, 1e-05
        %v437 = vrsqrt.pop %v434
        %v438 = vmul.f32 %v437, %v434
        %v439 = vmul.f32 %v438, %v437
        %v440 = vmul.f32 0.5, %v439
        %v441 = vsub.f32 1.5, %v440
        %v442 = vmul.f32 %v437, %v441
        %vm443 = vweird.f32 %v434
        %vm444 = vweird.f32 %v437
        %vm445 = vmor %vm443, %vm444
        %v446 = vsel %vm445, %v437, %v442
        %v447 = vrsqrt.pop %v435
        %v448 = vmul.f32 %v447, %v435
        %v449 = vmul.f32 %v448, %v447
        %v450 = vmul.f32 0.5, %v449
        %v451 = vsub.f32 1.5, %v450
        %v452 = vmul.f32 %v447, %v451
        %vm453 = vweird.f32 %v435
        %vm454 = vweird.f32 %v447
        %vm455 = vmor %vm453, %vm454
        %v456 = vsel %vm455, %v447, %v452
        %v457 = vrsqrt.pop %v436
        %v458 = vmul.f32 %v457, %v436
        %v459 = vmul.f32 %v458, %v457
        %v460 = vmul.f32 0.5, %v459
        %v461 = vsub.f32 1.5, %v460
        %v462 = vmul.f32 %v457, %v461
        %vm463 = vweird.f32 %v436
        %vm464 = vweird.f32 %v457
        %vm465 = vmor %vm463, %vm464
        %v466 = vsel %vm465, %v457, %v462
        %v467 = vmul.f32 %v416, %v446
        %v468 = vmul.f32 %v417, %v456
        %v469 = vmul.f32 %v418, %v466
        %v471 = vperm.slane %v393, 0
        %v473 = vmul.f32 %v467, %v471
        %v474 = vmul.f32 %v468, %v471
        %v475 = vmul.f32 %v469, %v471
        %v477 = vperm.slane %v394, 0
        %v479 = vadd.f32 %v473, %v477
        %v480 = vadd.f32 %v474, %v477
        %v481 = vadd.f32 %v475, %v477
        %v482 = vld [vmem:[#allocation3] sm:$0xff]
        %v483 = vld [vmem:[#allocation3 + $0x8] sm:$0xff]
        %v484 = vld [vmem:[#allocation3 + $0x10] sm:$0xff]
        %v485 = vld [vmem:[#allocation3 + $0x18] sm:$0xff]
        %v487 = vsel %vm395, %v479, 0
        %v490 = vsel %vm395, %v480, 0
        %v493 = vsel %vm395, %v481, 0
        %495 = vmatpush.msra.mxu0 0.0
        %496 = vmatpush.msra.mxu0 0.0
        %497 = vmatpush.msra.mxu0 0.0
        %498 = vmatpush.msra.mxu0 0.0
        %499 = vmatpush.msra.mxu0 0.0
        %500 = vmatpush.msra.mxu0 0.0
        %501 = vmatpush.msra.mxu0 0.0
        %502 = vmatpush.msra.mxu0 0.0
        %503 = vmatpush.msra.mxu0 0.0
        %504 = vmatpush.msra.mxu0 0.0
        %505 = vmatpush.msra.mxu0 0.0
        %506 = vmatpush.msra.mxu0 0.0
        %507 = vmatpush.msra.mxu0 %v485
        %508 = vmatpush.msra.mxu0 %v484
        %509 = vmatpush.msra.mxu0 %v483
        %510 = vmatpush.msra.mxu0 %v482
        %511 = vmatmul.f32.gmra.mxu0 %v487
        %v512 = vpop.f32.mrf.mxu0
        %v513 = vadd.f32 0.0, %v512
        %514 = vmatmul.f32.gmra.mxu0 %v490
        %v515 = vpop.f32.mrf.mxu0
        %v516 = vadd.f32 0.0, %v515
        %517 = vmatmul.f32.gmra.mxu0 %v493
        %v518 = vpop.f32.mrf.mxu0
        %v519 = vadd.f32 0.0, %v518
        %520 = vdwg.mxu0
        %v521 = vld [vmem:[#allocation6] sm:$0xff]
        %v522 = vld [vmem:[#allocation6 + $0x8] sm:$0xff]
        %v523 = vld [vmem:[#allocation6 + $0x10] sm:$0xff]
        %v524 = vld [vmem:[#allocation6 + $0x18] sm:$0xff]
        %525 = vmatpush.msra.mxu0 0.0
        %526 = vmatpush.msra.mxu0 0.0
        %527 = vmatpush.msra.mxu0 0.0
        %528 = vmatpush.msra.mxu0 0.0
        %529 = vmatpush.msra.mxu0 0.0
        %530 = vmatpush.msra.mxu0 0.0
        %531 = vmatpush.msra.mxu0 0.0
        %532 = vmatpush.msra.mxu0 0.0
        %533 = vmatpush.msra.mxu0 0.0
        %534 = vmatpush.msra.mxu0 0.0
        %535 = vmatpush.msra.mxu0 0.0
        %536 = vmatpush.msra.mxu0 0.0
        %537 = vmatpush.msra.mxu0 %v524
        %538 = vmatpush.msra.mxu0 %v523
        %539 = vmatpush.msra.mxu0 %v522
        %540 = vmatpush.msra.mxu0 %v521
        %541 = vmatmul.f32.gmra.mxu0 %v487
        %v542 = vpop.f32.mrf.mxu0
        %v543 = vadd.f32 0.0, %v542
        %544 = vmatmul.f32.gmra.mxu0 %v490
        %v545 = vpop.f32.mrf.mxu0
        %v546 = vadd.f32 0.0, %v545
        %547 = vmatmul.f32.gmra.mxu0 %v493
        %v548 = vpop.f32.mrf.mxu0
        %v549 = vadd.f32 0.0, %v548
        %550 = vdwg.mxu0
        %v551 = vxor.u32 %v543, 2147483648
        %v552 = vxor.u32 %v546, 2147483648
        %v553 = vxor.u32 %v549, 2147483648
        %v554 = vmul.f32 %v551, 1.442695
        %v555 = vpow.pop %v554
        %v556 = vmul.f32 %v552, 1.442695
        %v557 = vpow.pop %v556
        %v558 = vmul.f32 %v553, 1.442695
        %v559 = vpow.pop %v558
        %v560 = vadd.f32 %v555, 1.0
        %v561 = vadd.f32 %v557, 1.0
        %v562 = vadd.f32 %v559, 1.0
        %v563 = vrcp.pop %v560
        %v564 = vmul.f32 %v560, %v563
        %v565 = vsub.f32 1.0, %v564
        %v566 = vmul.f32 %v563, %v565
        %v567 = vadd.f32 %v563, %v566
        %vm568 = vweird.f32 %v560
        %vm569 = vweird.f32 %v563
        %vm570 = vmor %vm568, %vm569
        %v571 = vsel %vm570, %v563, %v567
        %v572 = vand.u32 2147483647, %v560
        %vm573 = vcmp.eq.f32.partialorder %v572, 8.507059e+37
        %v574 = vand.u32 %v560, 2147483648
        %v575 = vor.u32 1.1754944e-38, %v574
        %v576 = vsel %vm573, %v575, %v571
        %v577 = vmul.f32 1.0, %v576
        %v578 = vrcp.pop %v561
        %v579 = vmul.f32 %v561, %v578
        %v580 = vsub.f32 1.0, %v579
        %v581 = vmul.f32 %v578, %v580
        %v582 = vadd.f32 %v578, %v581
        %vm583 = vweird.f32 %v561
        %vm584 = vweird.f32 %v578
        %vm585 = vmor %vm583, %vm584
        %v586 = vsel %vm585, %v578, %v582
        %v587 = vand.u32 2147483647, %v561
        %vm588 = vcmp.eq.f32.partialorder %v587, 8.507059e+37
        %v589 = vand.u32 %v561, 2147483648
        %v590 = vor.u32 1.1754944e-38, %v589
        %v591 = vsel %vm588, %v590, %v586
        %v592 = vmul.f32 1.0, %v591
        %v593 = vrcp.pop %v562
        %v594 = vmul.f32 %v562, %v593
        %v595 = vsub.f32 1.0, %v594
        %v596 = vmul.f32 %v593, %v595
        %v597 = vadd.f32 %v593, %v596
        %vm598 = vweird.f32 %v562
        %vm599 = vweird.f32 %v593
        %vm600 = vmor %vm598, %vm599
        %v601 = vsel %vm600, %v593, %v597
        %v602 = vand.u32 2147483647, %v562
        %vm603 = vcmp.eq.f32.partialorder %v602, 8.507059e+37
        %v604 = vand.u32 %v562, 2147483648
        %v605 = vor.u32 1.1754944e-38, %v604
        %v606 = vsel %vm603, %v605, %v601
        %v607 = vmul.f32 1.0, %v606
        %v608 = vmul.f32 %v513, %v577
        %v609 = vmul.f32 %v516, %v592
        %v610 = vmul.f32 %v519, %v607
        %s611 = ssub.s32 %s388, %s380
        %s612 = sadd.s32 %s611, 6
        %s613 = scalar_lea.vmem [#allocation2], %s612
        %vm614 = vcmask 392192
        %615 = vst.msk [vmem:[%s613] sm:$0xff] %vm614, %v608
        %616 = vst.msk [vmem:[%s613 + $0x8] sm:$0xff] %vm614, %v609
        %617 = vst.msk [vmem:[%s613 + $0x10] sm:$0x3f] %vm381, %v610
        %v618 = vld [vmem:[%s5] sm:$0x7f]
        %v619 = vld [vmem:[#allocation2 + $0x3] sm:$0xff]
        %v620 = vld [vmem:[#allocation2 + $0xb] sm:$0xff]
        %v621 = vperm.slane %v618, 0
        %v622 = vmul.f32 %v619, %v621
        %v623 = vmul.f32 %v620, %v621
        %v624 = vadd.f32 %v622, 0.0
        %v625 = vadd.f32 %v623, 0.0
        %v626 = vld [vmem:[#allocation2 + $0x4] sm:$0xff]
        %v627 = vld [vmem:[#allocation2 + $0xc] sm:$0xff]
        %v628 = vperm.slane %v618, 1
        %v629 = vmul.f32 %v626, %v628
        %v630 = vmul.f32 %v627, %v628
        %v631 = vadd.f32 %v624, %v629
        %v632 = vadd.f32 %v625, %v630
        %v633 = vld [vmem:[#allocation2 + $0x5] sm:$0xff]
        %v634 = vld [vmem:[#allocation2 + $0xd] sm:$0xff]
        %v635 = vperm.slane %v618, 2
        %v636 = vmul.f32 %v633, %v635
        %v637 = vmul.f32 %v634, %v635
        %v638 = vadd.f32 %v631, %v636
        %v639 = vadd.f32 %v632, %v637
        %v640 = vld [vmem:[#allocation2 + $0x6] sm:$0xff]
        %v641 = vld [vmem:[#allocation2 + $0xe] sm:$0xff]
        %v642 = vperm.slane %v618, 3
        %v643 = vmul.f32 %v640, %v642
        %v644 = vmul.f32 %v641, %v642
        %v645 = vadd.f32 %v638, %v643
        %v646 = vadd.f32 %v639, %v644
        %v647 = vld [vmem:[#allocation2 + $0x7] sm:$0xff]
        %v648 = vld [vmem:[#allocation2 + $0xf] sm:$0xff]
        %v649 = vperm.slane %v618, 4
        %v650 = vmul.f32 %v647, %v649
        %v651 = vmul.f32 %v648, %v649
        %v652 = vadd.f32 %v645, %v650
        %v653 = vadd.f32 %v646, %v651
        %v654 = vld [vmem:[#allocation2 + $0x8] sm:$0xff]
        %v655 = vld [vmem:[#allocation2 + $0x10] sm:$0xff]
        %v656 = vperm.slane %v618, 5
        %v657 = vmul.f32 %v654, %v656
        %v658 = vmul.f32 %v655, %v656
        %v659 = vadd.f32 %v652, %v657
        %v660 = vadd.f32 %v653, %v658
        %v661 = vld [vmem:[#allocation2 + $0x9] sm:$0xff]
        %v662 = vld [vmem:[#allocation2 + $0x11] sm:$0xff]
        %v663 = vperm.slane %v618, 6
        %v664 = vmul.f32 %v661, %v663
        %v665 = vmul.f32 %v662, %v663
        %v666 = vadd.f32 %v659, %v664
        %v667 = vadd.f32 %v660, %v665
        %v668 = vld [vmem:[%s6] sm:$0x1]
        %v670 = vperm.slane %v668, 0
        %v672 = vmul.f32 %v666, %v670
        %v673 = vmul.f32 %v667, %v670
        %v674 = vld [vmem:[%s7] sm:$0x1]
        %v676 = vperm.slane %v674, 0
        %v678 = vadd.f32 %v672, %v676
        %v679 = vadd.f32 %v673, %v676
        %v680 = vxor.u32 %v678, 2147483648
        %v681 = vxor.u32 %v679, 2147483648
        %v682 = vmul.f32 %v680, 1.442695
        %v683 = vpow.pop %v682
        %v684 = vmul.f32 %v681, 1.442695
        %v685 = vpow.pop %v684
        %v686 = vadd.f32 %v683, 1.0
        %v687 = vadd.f32 %v685, 1.0
        %v688 = vrcp.pop %v686
        %v689 = vmul.f32 %v686, %v688
        %v690 = vsub.f32 1.0, %v689
        %v691 = vmul.f32 %v688, %v690
        %v692 = vadd.f32 %v688, %v691
        %vm693 = vweird.f32 %v686
        %vm694 = vweird.f32 %v688
        %vm695 = vmor %vm693, %vm694
        %v696 = vsel %vm695, %v688, %v692
        %v697 = vand.u32 2147483647, %v686
        %vm698 = vcmp.eq.f32.partialorder %v697, 8.507059e+37
        %v699 = vand.u32 %v686, 2147483648
        %v700 = vor.u32 1.1754944e-38, %v699
        %v701 = vsel %vm698, %v700, %v696
        %v702 = vmul.f32 1.0, %v701
        %v703 = vrcp.pop %v687
        %v704 = vmul.f32 %v687, %v703
        %v705 = vsub.f32 1.0, %v704
        %v706 = vmul.f32 %v703, %v705
        %v707 = vadd.f32 %v703, %v706
        %vm708 = vweird.f32 %v687
        %vm709 = vweird.f32 %v703
        %vm710 = vmor %vm708, %vm709
        %v711 = vsel %vm710, %v703, %v707
        %v712 = vand.u32 2147483647, %v687
        %vm713 = vcmp.eq.f32.partialorder %v712, 8.507059e+37
        %v714 = vand.u32 %v687, 2147483648
        %v715 = vor.u32 1.1754944e-38, %v714
        %v716 = vsel %vm713, %v715, %v711
        %v717 = vmul.f32 1.0, %v716
        %v718 = vmul.f32 %v678, %v702
        %v719 = vmul.f32 %v679, %v717
        %v720 = vld [vmem:[%s8] sm:$0xff]
        %v721 = vld [vmem:[%s8 + $0x8] sm:$0xff]
        %v722 = vld [vmem:[%s8 + $0x10] sm:$0xff]
        %v723 = vld [vmem:[%s8 + $0x18] sm:$0xff]
        %v724 = vld [vmem:[%s8 + $0x20] sm:$0xff]
        %v725 = vld [vmem:[%s8 + $0x28] sm:$0xff]
        %v727 = vsel %vm614, %v718, 0
        %v730 = vsel %vm614, %v719, 0
        %732 = vmatpush.msra.mxu0 0.0
        %733 = vmatpush.msra.mxu0 0.0
        %734 = vmatpush.msra.mxu0 0.0
        %735 = vmatpush.msra.mxu0 0.0
        %736 = vmatpush.msra.mxu0 0.0
        %737 = vmatpush.msra.mxu0 0.0
        %738 = vmatpush.msra.mxu0 0.0
        %739 = vmatpush.msra.mxu0 0.0
        %740 = vmatpush.msra.mxu0 0.0
        %741 = vmatpush.msra.mxu0 0.0
        %742 = vmatpush.msra.mxu0 %v725
        %743 = vmatpush.msra.mxu0 %v724
        %744 = vmatpush.msra.mxu0 %v723
        %745 = vmatpush.msra.mxu0 %v722
        %746 = vmatpush.msra.mxu0 %v721
        %747 = vmatpush.msra.mxu0 %v720
        %748 = vmatmul.f32.gmra.mxu0 %v727
        %v749 = vpop.f32.mrf.mxu0
        %v750 = vadd.f32 0.0, %v749
        %751 = vmatmul.f32.gmra.mxu0 %v730
        %v752 = vpop.f32.mrf.mxu0
        %v753 = vadd.f32 0.0, %v752
        %754 = vdwg.mxu0
        %755 = vst.msk [vmem:[%s373] sm:$0xff] %vm395, %v750
        %756 = vst.msk [vmem:[%s373 + $0x8] sm:$0xff] %vm395, %v753
        %s757 = sand.u32 %s241, 1
        %s758 = scalar_lea.sflag [#allocation5], %s757
        %s759 = sand.u32 %s241, 1
        %s760 = smul.addr %s759, 16
        %s761 = scalar_lea.vmem [#allocation8], %s760
        // Predicated region
        $region65: #{tpu_custom_call.1} parent=55 // pred_check
          %p762 = pneg %p251
        $region66: #{tpu_custom_call.1} parent=55 // pred_check_branch
          %764 = sbr.rel (%p762) target = $region68
        $region67: #{tpu_custom_call.1} parent=55 // pred_region
          %s765 = smul.u32 2, %s30
          %767 = vsyncadd %s758, 0
          %s768 = smul.addr %s29, 4
          %s769 = sadd.s32 %s765, %s768
          %s770 = smul.addr %s769, 8
          %s771 = scalar_lea.hbm %s9, %s770
          %s772 = sshll.u32 %s761, 4
          %s773 = int_to_ptr.vmem [resolvable:$true] %s772
          %s774 = sshll.u32 %s771, 4
          %s775 = int_to_ptr.hbm [resolvable:$true] %s774
          %780 = dma.vmem_to_hbm [thread:$0]  %s773, 256, %s775, %s758, 128, 128, 8
        $region68: #{tpu_custom_call.1} parent=55 // pred_fallthru
          _
      $region56: #{tpu_custom_call.1} parent=5 // pred_fallthru
        _
      %p781 = scmp.le.s32.totalorder 2, %s20
      // Predicated region
      $region69: #{tpu_custom_call.1} parent=5 // pred_check
        %p782 = pneg %p781
      $region70: #{tpu_custom_call.1} parent=5 // pred_check_branch
        %784 = sbr.rel (%p782) target = $region72
      $region71: #{tpu_custom_call.1} parent=5 // pred_region
        %s785 = ssub.s32 %s20, 2
        // Predicated region
        $region73: #{tpu_custom_call.1} parent=71 // pred_check
          %p786 = pneg %p257
        $region74: #{tpu_custom_call.1} parent=71 // pred_check_branch
          %788 = sbr.rel (%p786) target = $region76
        $region75: #{tpu_custom_call.1} parent=71 // pred_region
          %s789 = sand.u32 %s242, 1
          %s790 = scalar_lea.sflag [#allocation5], %s789
          %s791 = sand.u32 %s242, 1
          %s792 = smul.addr %s791, 16
          %s793 = scalar_lea.vmem [#allocation8], %s792
          %795 = dma.done %s790, 256
        $region76: #{tpu_custom_call.1} parent=71 // pred_fallthru
          _
      $region72: #{tpu_custom_call.1} parent=5 // pred_fallthru
        _
    $region6: #{tpu_custom_call.1} parent=1 // loop_footer
      %s24 = sadd.s32 1, %s20
    $region7: #{tpu_custom_call.1} parent=1 // loop_footer_branch
      %19 = sbr.rel target = $region3
    $region8: #{tpu_custom_call.1} parent=1 // loop_exit
      _
    %796 = vsyncpa [#allocation4], 1
    %s797 = scalar_lea.sflag [#allocation4], 1
    %798 = vsyncpa %s797, 1
    %799 = vsyncpa [#allocation7], 1
    %800 = vsyncpa [#allocation5], 1
    %s801 = scalar_lea.sflag [#allocation5], 1
    %802 = vsyncpa %s801, 1

</llo_original>
